<compile_context>
chip_gen: v7x
topology: tpu7x:2x2x1
jax: 0.10.0
libtpu: 0.0.40
codegen_flags: <defaults>
</compile_context>

<pallas_src>
import functools

import jax
import jax.numpy as jnp
from jax.experimental import pallas as pl
from jax.experimental.pallas import tpu as pltpu


def caps_kernel(x_ref, w_ref, expm_ref, redm_ref, qm_ref, o_ref, *,
                num_capsule, dim_capsule, routings, seq_len):
    NC, DC = num_capsule, dim_capsule
    NCDC = NC * DC
    R = x_ref.shape[1]          # TB * seq_len rows in this batch tile
    TB = R // seq_len
    f32 = jnp.float32

    x = x_ref[0]                # (R, D_in)  native dtype (bf16 stays on MXU path)
    w = w_ref[...]              # (D_in, NCDC)
    exp_m = expm_ref[...]       # (NC, NCDC)   capsule -> its DC lanes (expand)
    red_m = redm_ref[...]       # (NCDC, NC)   DC lanes -> capsule       (reduce)
    q_m = qm_ref[...]           # (NCDC, NCDC) 1 iff lanes share a capsule

    # Single fused projection on the MXU:
    #   u[r, i*DC + k] == u_hat of capsule i, coord k, for input row r.
    u = jnp.dot(x, w, preferred_element_type=f32)            # (R, NCDC) f32

    def seg_sum(v):
        # (R, NCDC) -> (TB, NCDC): sum the seq_len rows of each batch element
        # (sublane reduction; no quadratic segment matrices).
        return jnp.sum(v.reshape(TB, seq_len, NCDC), axis=1)

    def seg_bcast(v):
        # (TB, NCDC) -> (R, NCDC): copy each batch element's row to its rows.
        return jnp.broadcast_to(v.reshape(TB, 1, NCDC),
                                (TB, seq_len, NCDC)).reshape(R, NCDC)

    def squash(s):
        # per-capsule squared norm broadcast back to each lane of that capsule
        ssn = jnp.dot(s * s, q_m, preferred_element_type=f32)   # (TB, NCDC)
        return s * jax.lax.rsqrt(ssn + 1e-07)

    # ---- dynamic routing (static loop, fully vectorized) --------------------
    # Iteration 0: b == 0, so softmax over capsules is exactly 1/NC -> skip the
    # softmax / expand dot entirely and just scale the segment sum.
    outputs = squash(seg_sum(u) * (1.0 / NC))                    # (TB, NCDC)

    for _ in range(1, routings):
        # b[r, i] = sum_k outputs[batch(r), i*DC+k] * u[r, i*DC+k]
        b = jnp.dot(u * seg_bcast(outputs), red_m,
                    preferred_element_type=f32)                  # (R, NC)
        # softmax over the capsule axis; 1/sum on the EUP slot
        e = jnp.exp(b - jnp.max(b, axis=-1, keepdims=True))
        c = e * pl.reciprocal(jnp.sum(e, axis=-1, keepdims=True),
                              approx=True)                       # (R, NC)
        # expand each routing weight to its capsule's DC lanes, weight u_hat,
        # segment-sum per batch element, squash.
        c_full = jnp.dot(c, exp_m, preferred_element_type=f32)   # (R, NCDC)
        outputs = squash(seg_sum(c_full * u))                    # (TB, NCDC)

    # lane-dense output slab (TB, NC*DC); the wrapper reshapes to (B, NC, DC)
    o_ref[0] = outputs.astype(o_ref.dtype)


def _build_capsule_constants(num_capsule, dim_capsule):
    """Tiny 0/1 matrices used inside the kernel; built once in the wrapper."""
    NC, DC = num_capsule, dim_capsule
    NCDC = NC * DC
    lane = jnp.arange(NCDC, dtype=jnp.int32)
    cap = jnp.arange(NC, dtype=jnp.int32)
    exp_m = (lane[None, :] // DC == cap[:, None]).astype(jnp.float32)   # (NC, NCDC)
    red_m = exp_m.T                                                     # (NCDC, NC)
    q_m = (lane[:, None] // DC == lane[None, :] // DC).astype(jnp.float32)
    return exp_m, red_m, q_m


def _choose_tb(batch, seq_padded, d_in, ncdc):
    """Batch elements per grid step.

    With the reshape-based segment sum nothing quadratic in TB stays live, so
    the cap is set purely by the per-row working set (x row + a few (·, NCDC)
    f32 intermediates).  When B >= 2 we keep at least 2 grid steps so the
    'parallel' grid axis can use both TensorCores on v7x (harmless ~0.35 us of
    extra pipeline overhead on single-TC chips).  TB=1 is always legal because
    the kernel's blocks are laid out as (1, TB*S, D) / (1, TB, NCDC)."""
    bytes_per_row = 4 * (d_in + 3 * ncdc)
    row_cap = max(seq_padded, (4 * 1024 * 1024) // max(bytes_per_row, 1))
    best = 1
    for tb in range(1, batch + 1):
        if batch % tb:
            continue
        if tb * seq_padded > row_cap:
            continue
        if batch >= 2 and (batch // tb) < 2:
            continue        # keep >= 2 grid steps (v7x dual-TC)
        best = tb
    return best


def caps_layer(x, W, num_capsule, dim_capsule, routings):
    """x: (B, S, D_in); W: (1, D_in, NC*DC) as in the PyTorch module."""
    B, S, D_in = x.shape
    NC, DC = num_capsule, dim_capsule
    NCDC = NC * DC
    W2 = W.reshape(D_in, NCDC)

    # Pad the sequence axis to a sublane multiple so the in-kernel segment sum
    # is a clean (TB, S, NCDC) sublane reduction; zero rows are exact no-ops.
    Sp = ((S + 7) // 8) * 8
    if Sp != S:
        x = jnp.pad(x, ((0, 0), (0, Sp - S), (0, 0)))

    TB = _choose_tb(B, Sp, D_in, NCDC)
    G = B // TB
    x3 = x.reshape(G, TB * Sp, D_in)        # free wrapper-side relayout

    exp_m, red_m, q_m = _build_capsule_constants(NC, DC)

    kernel = functools.partial(
        caps_kernel,
        num_capsule=NC, dim_capsule=DC, routings=routings, seq_len=Sp)

    out = pl.pallas_call(
        kernel,
        out_shape=jax.ShapeDtypeStruct((G, TB, NCDC), x.dtype),
        grid_spec=pltpu.PrefetchScalarGridSpec(
            num_scalar_prefetch=0,
            grid=(G,),
            in_specs=[
                pl.BlockSpec((1, TB * Sp, D_in), lambda g: (g, 0, 0)),
                # Constant blocks: the block index never changes across the
                # grid, so Pallas DMAs them once and never re-fetches.
                pl.BlockSpec((D_in, NCDC), lambda g: (0, 0)),
                pl.BlockSpec((NC, NCDC), lambda g: (0, 0)),
                pl.BlockSpec((NCDC, NC), lambda g: (0, 0)),
                pl.BlockSpec((NCDC, NCDC), lambda g: (0, 0)),
            ],
            out_specs=pl.BlockSpec((1, TB, NCDC), lambda g: (g, 0, 0)),
        ),
        compiler_params=pltpu.CompilerParams(
            dimension_semantics=("parallel",),
            vmem_limit_bytes=32 * 1024 * 1024),
    )(x3, W2, exp_m, red_m, q_m)

    return out.reshape(B, NC, DC)


def caps_layer_ref(x, W, num_capsule, dim_capsule, routings):
    """Pure-JAX reference mirroring the PyTorch forward exactly."""
    B, S, _ = x.shape
    u = jnp.matmul(x, W)                                                 # (B, S, NC*DC)
    u = u.reshape(B, S, num_capsule, dim_capsule).transpose(0, 2, 1, 3)  # (B,NC,S,DC)
    b = jnp.zeros((B, num_capsule, S), x.dtype)
    outputs = None
    for i in range(routings):
        c = jax.nn.softmax(b, axis=1)                                    # softmax over NC
        s = jnp.einsum('bij,bijk->bik', c, u)                            # (B, NC, DC)
        ssn = jnp.sum(s * s, axis=-1, keepdims=True)
        outputs = s / jnp.sqrt(ssn + 1e-07)
        if i < routings - 1:
            b = jnp.einsum('bik,bijk->bij', outputs, u)
    return outputs


if __name__ == "__main__":
    # Small shapes consistent with the module's forward:
    batch = 2
    input_num_capsule = 8     # sequence length
    input_dim_capsule = 32    # hidden size
    num_capsule = 4
    dim_capsule = 8
    routings = 3

    key = jax.random.PRNGKey(0)
    kx, kw = jax.random.split(key)

    x = jax.random.normal(kx, (batch, input_num_capsule, input_dim_capsule),
                          dtype=jnp.float32)

    # Deterministic xavier-normal-like init of W (shape as in the PyTorch
    # module: (1, input_dim_capsule, num_capsule * dim_capsule)).
    fan_in = input_dim_capsule * (num_capsule * dim_capsule)
    fan_out = 1 * (num_capsule * dim_capsule)
    std = (2.0 / (fan_in + fan_out)) ** 0.5
    W = std * jax.random.normal(
        kw, (1, input_dim_capsule, num_capsule * dim_capsule), dtype=jnp.float32)

    out = caps_layer(x, W, num_capsule, dim_capsule, routings)
    out = jax.block_until_ready(out)

    ref = caps_layer_ref(x, W, num_capsule, dim_capsule, routings)
    assert out.shape == (batch, num_capsule, dim_capsule)

    # Tolerance accounts for MXU default-precision rounding of the f32
    # projection (both the kernel and the XLA reference run the matmul at the
    # TPU's default precision) and the approximate EUP reciprocal used in the
    # softmax; algorithmic errors (wrong softmax axis, wrong eps, missing
    # squash) are orders of magnitude larger than this.
    assert jnp.allclose(out, ref, atol=5e-3, rtol=5e-3), (
        f"mismatch: max abs err {jnp.max(jnp.abs(out - ref))}")
    # squash normalizes each capsule vector to (near-)unit norm — sanity check.
    norms = jnp.sqrt(jnp.sum(out * out, axis=-1))
    assert jnp.allclose(norms, jnp.ones_like(norms), atol=1e-3)

    print("KERNEL_OK")
</pallas_src>

<mosaic_0001>
module attributes {stable_mosaic.version = 11 : i64} {
  func.func @caps_kernel(%arg0: i32, %arg1: memref<1x8x32xf32, #tpu.memory_space<vmem>>, %arg2: memref<32x32xf32, #tpu.memory_space<vmem>>, %arg3: memref<4x32xf32, #tpu.memory_space<vmem>>, %arg4: memref<32x4xf32, #tpu.memory_space<vmem>>, %arg5: memref<32x32xf32, #tpu.memory_space<vmem>>, %arg6: memref<1x1x32xf32, #tpu.memory_space<vmem>>) attributes {dimension_semantics = [#tpu.dimension_semantics<parallel>], iteration_bounds = array<i64: 2>, scalar_prefetch = 0 : i64, scratch_operands = 0 : i64, tpu.core_type = #tpu.core_type<tc>, window_params = [{transform_indices = @transform_0, window_bounds = array<i64: 1, 8, 32>}, {pipeline_mode = #tpu.pipeline_mode<synchronous>, transform_indices = @transform_1, window_bounds = array<i64: 32, 32>}, {pipeline_mode = #tpu.pipeline_mode<synchronous>, transform_indices = @transform_2, window_bounds = array<i64: 4, 32>}, {pipeline_mode = #tpu.pipeline_mode<synchronous>, transform_indices = @transform_3, window_bounds = array<i64: 32, 4>}, {pipeline_mode = #tpu.pipeline_mode<synchronous>, transform_indices = @transform_4, window_bounds = array<i64: 32, 32>}, {transform_indices = @transform_5, window_bounds = array<i64: 1, 1, 32>}]} {
    %c0 = arith.constant 0 : index
    %c0_0 = arith.constant 0 : index
    %c0_1 = arith.constant 0 : index
    %0 = vector.load %arg1[%c0, %c0_0, %c0_1] : memref<1x8x32xf32, #tpu.memory_space<vmem>>, vector<1x8x32xf32>
    %1 = vector.shape_cast %0 : vector<1x8x32xf32> to vector<8x32xf32>
    %c0_2 = arith.constant 0 : index
    %c0_3 = arith.constant 0 : index
    %2 = vector.load %arg2[%c0_2, %c0_3] : memref<32x32xf32, #tpu.memory_space<vmem>>, vector<32x32xf32>
    %c0_4 = arith.constant 0 : index
    %c0_5 = arith.constant 0 : index
    %3 = vector.load %arg3[%c0_4, %c0_5] : memref<4x32xf32, #tpu.memory_space<vmem>>, vector<4x32xf32>
    %c0_6 = arith.constant 0 : index
    %c0_7 = arith.constant 0 : index
    %4 = vector.load %arg4[%c0_6, %c0_7] : memref<32x4xf32, #tpu.memory_space<vmem>>, vector<32x4xf32>
    %c0_8 = arith.constant 0 : index
    %c0_9 = arith.constant 0 : index
    %5 = vector.load %arg5[%c0_8, %c0_9] : memref<32x32xf32, #tpu.memory_space<vmem>>, vector<32x32xf32>
    %cst = arith.constant dense<0.000000e+00> : vector<8x32xf32>
    %6 = tpu.matmul %1, %2, %cst {dimension_numbers = #tpu.dot_dimension_numbers<[1], [0], [0], [1], [0, 0, 1, 1], [], []>} : vector<8x32xf32>, vector<32x32xf32>, vector<8x32xf32> -> vector<8x32xf32>
    %7 = vector.shape_cast %6 : vector<8x32xf32> to vector<1x8x32xf32>
    %cst_10 = arith.constant dense<0.000000e+00> : vector<1x32xf32>
    %8 = vector.multi_reduction <add>, %7, %cst_10 [1] : vector<1x8x32xf32> to vector<1x32xf32>
    %cst_11 = arith.constant 2.500000e-01 : f32
    %9 = vector.broadcast %cst_11 : f32 to vector<1x32xf32>
    %10 = arith.mulf %8, %9 : vector<1x32xf32>
    %11 = arith.mulf %10, %10 : vector<1x32xf32>
    %cst_12 = arith.constant dense<0.000000e+00> : vector<1x32xf32>
    %12 = tpu.matmul %11, %5, %cst_12 {dimension_numbers = #tpu.dot_dimension_numbers<[1], [0], [0], [1], [0, 0, 1, 1], [], []>} : vector<1x32xf32>, vector<32x32xf32>, vector<1x32xf32> -> vector<1x32xf32>
    %cst_13 = arith.constant 1.000000e-07 : f32
    %13 = vector.broadcast %cst_13 : f32 to vector<1x32xf32>
    %14 = arith.addf %12, %13 : vector<1x32xf32>
    %15 = math.rsqrt %14 : vector<1x32xf32>
    %16 = arith.mulf %10, %15 : vector<1x32xf32>
    %17 = vector.shape_cast %16 : vector<1x32xf32> to vector<1x1x32xf32>
    %18 = vector.shape_cast %17 : vector<1x1x32xf32> to vector<1x1x32xf32>
    %19 = vector.broadcast %18 : vector<1x1x32xf32> to vector<1x8x32xf32>
    %20 = vector.shape_cast %19 : vector<1x8x32xf32> to vector<8x32xf32>
    %21 = arith.mulf %6, %20 : vector<8x32xf32>
    %cst_14 = arith.constant dense<0.000000e+00> : vector<8x4xf32>
    %22 = tpu.matmul %21, %4, %cst_14 {dimension_numbers = #tpu.dot_dimension_numbers<[1], [0], [0], [1], [0, 0, 1, 1], [], []>} : vector<8x32xf32>, vector<32x4xf32>, vector<8x4xf32> -> vector<8x4xf32>
    %cst_15 = arith.constant dense<0xFF800000> : vector<8xf32>
    %23 = vector.multi_reduction <maximumf>, %22, %cst_15 [1] : vector<8x4xf32> to vector<8xf32>
    %24 = vector.shape_cast %23 : vector<8xf32> to vector<8x1xf32>
    %25 = vector.broadcast %24 : vector<8x1xf32> to vector<8x4xf32>
    %26 = arith.subf %22, %25 : vector<8x4xf32>
    %27 = math.exp %26 : vector<8x4xf32>
    %cst_16 = arith.constant dense<0.000000e+00> : vector<8xf32>
    %28 = vector.multi_reduction <add>, %27, %cst_16 [1] : vector<8x4xf32> to vector<8xf32>
    %29 = vector.shape_cast %28 : vector<8xf32> to vector<8x1xf32>
    %30 = tpu.reciprocal %29 {approx = true} : vector<8x1xf32> -> vector<8x1xf32>
    %31 = vector.broadcast %30 : vector<8x1xf32> to vector<8x4xf32>
    %32 = arith.mulf %27, %31 : vector<8x4xf32>
    %cst_17 = arith.constant dense<0.000000e+00> : vector<8x32xf32>
    %33 = tpu.matmul %32, %3, %cst_17 {dimension_numbers = #tpu.dot_dimension_numbers<[1], [0], [0], [1], [0, 0, 1, 1], [], []>} : vector<8x4xf32>, vector<4x32xf32>, vector<8x32xf32> -> vector<8x32xf32>
    %34 = arith.mulf %33, %6 : vector<8x32xf32>
    %35 = vector.shape_cast %34 : vector<8x32xf32> to vector<1x8x32xf32>
    %cst_18 = arith.constant dense<0.000000e+00> : vector<1x32xf32>
    %36 = vector.multi_reduction <add>, %35, %cst_18 [1] : vector<1x8x32xf32> to vector<1x32xf32>
    %37 = arith.mulf %36, %36 : vector<1x32xf32>
    %cst_19 = arith.constant dense<0.000000e+00> : vector<1x32xf32>
    %38 = tpu.matmul %37, %5, %cst_19 {dimension_numbers = #tpu.dot_dimension_numbers<[1], [0], [0], [1], [0, 0, 1, 1], [], []>} : vector<1x32xf32>, vector<32x32xf32>, vector<1x32xf32> -> vector<1x32xf32>
    %cst_20 = arith.constant 1.000000e-07 : f32
    %39 = vector.broadcast %cst_20 : f32 to vector<1x32xf32>
    %40 = arith.addf %38, %39 : vector<1x32xf32>
    %41 = math.rsqrt %40 : vector<1x32xf32>
    %42 = arith.mulf %36, %41 : vector<1x32xf32>
    %43 = vector.shape_cast %42 : vector<1x32xf32> to vector<1x1x32xf32>
    %44 = vector.shape_cast %43 : vector<1x1x32xf32> to vector<1x1x32xf32>
    %45 = vector.broadcast %44 : vector<1x1x32xf32> to vector<1x8x32xf32>
    %46 = vector.shape_cast %45 : vector<1x8x32xf32> to vector<8x32xf32>
    %47 = arith.mulf %6, %46 : vector<8x32xf32>
    %cst_21 = arith.constant dense<0.000000e+00> : vector<8x4xf32>
    %48 = tpu.matmul %47, %4, %cst_21 {dimension_numbers = #tpu.dot_dimension_numbers<[1], [0], [0], [1], [0, 0, 1, 1], [], []>} : vector<8x32xf32>, vector<32x4xf32>, vector<8x4xf32> -> vector<8x4xf32>
    %cst_22 = arith.constant dense<0xFF800000> : vector<8xf32>
    %49 = vector.multi_reduction <maximumf>, %48, %cst_22 [1] : vector<8x4xf32> to vector<8xf32>
    %50 = vector.shape_cast %49 : vector<8xf32> to vector<8x1xf32>
    %51 = vector.broadcast %50 : vector<8x1xf32> to vector<8x4xf32>
    %52 = arith.subf %48, %51 : vector<8x4xf32>
    %53 = math.exp %52 : vector<8x4xf32>
    %cst_23 = arith.constant dense<0.000000e+00> : vector<8xf32>
    %54 = vector.multi_reduction <add>, %53, %cst_23 [1] : vector<8x4xf32> to vector<8xf32>
    %55 = vector.shape_cast %54 : vector<8xf32> to vector<8x1xf32>
    %56 = tpu.reciprocal %55 {approx = true} : vector<8x1xf32> -> vector<8x1xf32>
    %57 = vector.broadcast %56 : vector<8x1xf32> to vector<8x4xf32>
    %58 = arith.mulf %53, %57 : vector<8x4xf32>
    %cst_24 = arith.constant dense<0.000000e+00> : vector<8x32xf32>
    %59 = tpu.matmul %58, %3, %cst_24 {dimension_numbers = #tpu.dot_dimension_numbers<[1], [0], [0], [1], [0, 0, 1, 1], [], []>} : vector<8x4xf32>, vector<4x32xf32>, vector<8x32xf32> -> vector<8x32xf32>
    %60 = arith.mulf %59, %6 : vector<8x32xf32>
    %61 = vector.shape_cast %60 : vector<8x32xf32> to vector<1x8x32xf32>
    %cst_25 = arith.constant dense<0.000000e+00> : vector<1x32xf32>
    %62 = vector.multi_reduction <add>, %61, %cst_25 [1] : vector<1x8x32xf32> to vector<1x32xf32>
    %63 = arith.mulf %62, %62 : vector<1x32xf32>
    %cst_26 = arith.constant dense<0.000000e+00> : vector<1x32xf32>
    %64 = tpu.matmul %63, %5, %cst_26 {dimension_numbers = #tpu.dot_dimension_numbers<[1], [0], [0], [1], [0, 0, 1, 1], [], []>} : vector<1x32xf32>, vector<32x32xf32>, vector<1x32xf32> -> vector<1x32xf32>
    %cst_27 = arith.constant 1.000000e-07 : f32
    %65 = vector.broadcast %cst_27 : f32 to vector<1x32xf32>
    %66 = arith.addf %64, %65 : vector<1x32xf32>
    %67 = math.rsqrt %66 : vector<1x32xf32>
    %68 = arith.mulf %62, %67 : vector<1x32xf32>
    %c0_28 = arith.constant 0 : index
    %c0_29 = arith.constant 0 : index
    %c0_30 = arith.constant 0 : index
    %69 = vector.load %arg6[%c0_28, %c0_29, %c0_30] : memref<1x1x32xf32, #tpu.memory_space<vmem>>, vector<1x1x32xf32>
    %70 = vector.shape_cast %69 : vector<1x1x32xf32> to vector<1x32xf32>
    %71 = vector.shape_cast %68 : vector<1x32xf32> to vector<1x1x32xf32>
    tpu.vector_store %arg6[%c0_28, %c0_29, %c0_30], %71 {strides = array<i32>} : memref<1x1x32xf32, #tpu.memory_space<vmem>>, vector<1x1x32xf32>,
    return
  }
  func.func @transform_0(%arg0: i32) -> (i32, i32, i32) {
    %c0_i32 = arith.constant 0 : i32
    %c0_i32_0 = arith.constant 0 : i32
    %c0_i32_1 = arith.constant 0 : i32
    return %arg0, %c0_i32, %c0_i32_0 : i32, i32, i32
  }
  func.func @transform_1(%arg0: i32) -> (i32, i32) {
    %c0_i32 = arith.constant 0 : i32
    %c0_i32_0 = arith.constant 0 : i32
    %c0_i32_1 = arith.constant 0 : i32
    return %c0_i32, %c0_i32_0 : i32, i32
  }
  func.func @transform_2(%arg0: i32) -> (i32, i32) {
    %c0_i32 = arith.constant 0 : i32
    %c0_i32_0 = arith.constant 0 : i32
    %c0_i32_1 = arith.constant 0 : i32
    return %c0_i32, %c0_i32_0 : i32, i32
  }
  func.func @transform_3(%arg0: i32) -> (i32, i32) {
    %c0_i32 = arith.constant 0 : i32
    %c0_i32_0 = arith.constant 0 : i32
    %c0_i32_1 = arith.constant 0 : i32
    return %c0_i32, %c0_i32_0 : i32, i32
  }
  func.func @transform_4(%arg0: i32) -> (i32, i32) {
    %c0_i32 = arith.constant 0 : i32
    %c0_i32_0 = arith.constant 0 : i32
    %c0_i32_1 = arith.constant 0 : i32
    return %c0_i32, %c0_i32_0 : i32, i32
  }
  func.func @transform_5(%arg0: i32) -> (i32, i32, i32) {
    %c0_i32 = arith.constant 0 : i32
    %c0_i32_0 = arith.constant 0 : i32
    %c0_i32_1 = arith.constant 0 : i32
    return %arg0, %c0_i32, %c0_i32_0 : i32, i32, i32
  }
}

</mosaic_0001>

<llo_original>
// kernel: tpu_custom_call.1
$region0: #{tpu_custom_call.1}
  #allocation0 [shape = 'u32[]', space=smem, size = 0x4, offset = 0x4, fixed_abs, tag = 'smem constant byte address 0x4 - core index']
  #allocation1 [shape = 'u32[144,128]{1,0:T(1,128)}', space=vmem, size = 0x12000, scoped, tag = 'internal scratch']
  %s0 = inlined_call_operand.hbm [shape: f32[2,8,32], index: 0, kind: input, shape index: {}]
  %s1 = inlined_call_operand.vmem [shape: f32[32,32], index: 1, kind: input, shape index: {}]
  %s2 = inlined_call_operand.vmem [shape: f32[4,32], index: 2, kind: input, shape index: {}]
  %s3 = inlined_call_operand.vmem [shape: f32[32,4], index: 3, kind: input, shape index: {}]
  %s4 = inlined_call_operand.hbm [shape: f32[32,32], index: 4, kind: input, shape index: {}]
  %s5 = inlined_call_operand.hbm [shape: f32[2,1,32], index: 5, kind: output, shape index: {}]
  %s6 = sld [smem:[#allocation0]]
  $region61: #{tpu_custom_call.1} parent=0
    _
  %s8 = ssub.s32 1, %s6
  %s9 = scalar_select 0, %s8, %s6
  $region1: #{tpu_custom_call.1} parent=0
    #allocation2 [shape = 'u8[8192]{0}', space=vmem, size = 0x2000, scoped, tag = 'input window, operand 0']
    #allocation3 [shape = 's32[2]{0}', space=sflag, size = 0x8, scoped, tag = 'scoped memory for tpu_custom_call.1']
    #allocation4 [shape = 's32[2]{0}', space=sflag, size = 0x8, scoped, tag = 'scoped memory for tpu_custom_call.1']
    #allocation5 [shape = 'u8[16384]{0}', space=vmem, size = 0x4000, scoped, tag = 'input window, operand 4, single buffered']
    #allocation6 [shape = 's32[1]{0}', space=sflag, size = 0x4, scoped, tag = 'scoped memory for tpu_custom_call.1']
    #allocation7 [shape = 'u8[1024]{0}', space=vmem, size = 0x400, scoped, tag = 'output window, operand 0']
    %10 = vsyncpa [#allocation3], 0
    %s11 = scalar_lea.sflag [#allocation3], 1
    %12 = vsyncpa %s11, 0
    %13 = vsyncpa [#allocation6], 0
    %14 = vsyncpa [#allocation4], 0
    %s15 = scalar_lea.sflag [#allocation4], 1
    %16 = vsyncpa %s15, 0
    loop: start=0, step=1, limit=4
    $region2: #{tpu_custom_call.1} parent=1 // loop_pre_header
      _
    $region3: #{tpu_custom_call.1} parent=1 // loop_header
      %s18 = sphi 0, %s22
      %p19 = scmp.ge.s32.totalorder %s18, 4
      %s28 = sphi 0, %s30
      %s31 = sphi 0, %s28
      %s32 = sphi 0, %s31
      %s48 = sphi 0, %s32
      %s52 = sphi 0, %s52
      %s54 = sphi 0, %s52
      %s55 = sphi 0, %s54
      %s69 = sphi 0, %s55
      %s73 = sphi 0, %s73
      %s75 = sphi 0, %s73
      %s76 = sphi 0, %s75
      %s90 = sphi 0, %s76
      %s94 = sphi 0, %s94
      %s96 = sphi 0, %s94
      %s97 = sphi 0, %s96
      %s111 = sphi 0, %s97
      %s115 = sphi 0, %s115
      %s117 = sphi 0, %s115
      %s118 = sphi 0, %s117
      %s132 = sphi 0, %s118
      %s138 = sphi 0, %s140
      %s141 = sphi 0, %s138
      %s142 = sphi 0, %s141
      %s158 = sphi 0, %s142
    $region4: #{tpu_custom_call.1} parent=1 // loop_header_branch
      %21 = sbr.rel (%p19) target = $region8
    $region5: #{tpu_custom_call.1} parent=1 // loop_body
      %s23 = ssub.s32 %s18, 1
      %s24 = ssub.s32 %s18, 2
      %s25 = sadd.s32 %s18, 1
      %s26 = ssub.s32 %s18, %s25
      %p27 = scmp.eq.s32.totalorder %s26, 0
      %s29 = sadd.s32 %s28, 1
      %s30 = scalar_select %p27, %s28, %s29
      %p33 = pneg %p27
      %p34 = scmp.eq.s32.totalorder %s18, 1
      %p35 = por %p33, %p34
      %p36 = scmp.ne.s32.totalorder %s28, %s31
      %p37 = scmp.eq.s32.totalorder %s18, 0
      %p38 = por %p36, %p37
      %p39 = scmp.ne.s32.totalorder %s28, %s31
      %p40 = scmp.eq.s32.totalorder %s23, 1
      %p41 = por %p39, %p40
      %p42 = scmp.ne.s32.totalorder %s31, %s32
      %p43 = scmp.eq.s32.totalorder %s23, 0
      %p44 = por %p42, %p43
      %p45 = scmp.ne.s32.totalorder %s31, %s32
      %p46 = scmp.eq.s32.totalorder %s24, 1
      %p47 = por %p45, %p46
      %p49 = scmp.ne.s32.totalorder %s32, %s48
      %p50 = scmp.eq.s32.totalorder %s24, 0
      %p51 = por %p49, %p50
      %s53 = sadd.s32 %s52, 1
      %p56 = scmp.eq.s32.totalorder %s18, 1
      %p57 = scmp.ne.s32.totalorder %s52, %s54
      %p58 = scmp.eq.s32.totalorder %s18, 0
      %p59 = por %p57, %p58
      %p60 = scmp.ne.s32.totalorder %s52, %s54
      %p61 = scmp.eq.s32.totalorder %s23, 1
      %p62 = por %p60, %p61
      %p63 = scmp.ne.s32.totalorder %s54, %s55
      %p64 = scmp.eq.s32.totalorder %s23, 0
      %p65 = por %p63, %p64
      %p66 = scmp.ne.s32.totalorder %s54, %s55
      %p67 = scmp.eq.s32.totalorder %s24, 1
      %p68 = por %p66, %p67
      %p70 = scmp.ne.s32.totalorder %s55, %s69
      %p71 = scmp.eq.s32.totalorder %s24, 0
      %p72 = por %p70, %p71
      %s74 = sadd.s32 %s73, 1
      %p77 = scmp.eq.s32.totalorder %s18, 1
      %p78 = scmp.ne.s32.totalorder %s73, %s75
      %p79 = scmp.eq.s32.totalorder %s18, 0
      %p80 = por %p78, %p79
      %p81 = scmp.ne.s32.totalorder %s73, %s75
      %p82 = scmp.eq.s32.totalorder %s23, 1
      %p83 = por %p81, %p82
      %p84 = scmp.ne.s32.totalorder %s75, %s76
      %p85 = scmp.eq.s32.totalorder %s23, 0
      %p86 = por %p84, %p85
      %p87 = scmp.ne.s32.totalorder %s75, %s76
      %p88 = scmp.eq.s32.totalorder %s24, 1
      %p89 = por %p87, %p88
      %p91 = scmp.ne.s32.totalorder %s76, %s90
      %p92 = scmp.eq.s32.totalorder %s24, 0
      %p93 = por %p91, %p92
      %s95 = sadd.s32 %s94, 1
      %p98 = scmp.eq.s32.totalorder %s18, 1
      %p99 = scmp.ne.s32.totalorder %s94, %s96
      %p100 = scmp.eq.s32.totalorder %s18, 0
      %p101 = por %p99, %p100
      %p102 = scmp.ne.s32.totalorder %s94, %s96
      %p103 = scmp.eq.s32.totalorder %s23, 1
      %p104 = por %p102, %p103
      %p105 = scmp.ne.s32.totalorder %s96, %s97
      %p106 = scmp.eq.s32.totalorder %s23, 0
      %p107 = por %p105, %p106
      %p108 = scmp.ne.s32.totalorder %s96, %s97
      %p109 = scmp.eq.s32.totalorder %s24, 1
      %p110 = por %p108, %p109
      %p112 = scmp.ne.s32.totalorder %s97, %s111
      %p113 = scmp.eq.s32.totalorder %s24, 0
      %p114 = por %p112, %p113
      %s116 = sadd.s32 %s115, 1
      %p119 = scmp.eq.s32.totalorder %s18, 1
      %p120 = scmp.ne.s32.totalorder %s115, %s117
      %p121 = scmp.eq.s32.totalorder %s18, 0
      %p122 = por %p120, %p121
      %p123 = scmp.ne.s32.totalorder %s115, %s117
      %p124 = scmp.eq.s32.totalorder %s23, 1
      %p125 = por %p123, %p124
      %p126 = scmp.ne.s32.totalorder %s117, %s118
      %p127 = scmp.eq.s32.totalorder %s23, 0
      %p128 = por %p126, %p127
      %p129 = scmp.ne.s32.totalorder %s117, %s118
      %p130 = scmp.eq.s32.totalorder %s24, 1
      %p131 = por %p129, %p130
      %p133 = scmp.ne.s32.totalorder %s118, %s132
      %p134 = scmp.eq.s32.totalorder %s24, 0
      %p135 = por %p133, %p134
      %s136 = ssub.s32 %s18, %s25
      %p137 = scmp.eq.s32.totalorder %s136, 0
      %s139 = sadd.s32 %s138, 1
      %s140 = scalar_select %p137, %s138, %s139
      %p143 = pneg %p137
      %p144 = scmp.eq.s32.totalorder %s18, 1
      %p145 = por %p143, %p144
      %p146 = scmp.ne.s32.totalorder %s138, %s141
      %p147 = scmp.eq.s32.totalorder %s18, 0
      %p148 = por %p146, %p147
      %p149 = scmp.ne.s32.totalorder %s138, %s141
      %p150 = scmp.eq.s32.totalorder %s23, 1
      %p151 = por %p149, %p150
      %p152 = scmp.ne.s32.totalorder %s141, %s142
      %p153 = scmp.eq.s32.totalorder %s23, 0
      %p154 = por %p152, %p153
      %p155 = scmp.ne.s32.totalorder %s141, %s142
      %p156 = scmp.eq.s32.totalorder %s24, 1
      %p157 = por %p155, %p156
      %p159 = scmp.ne.s32.totalorder %s142, %s158
      %p160 = scmp.eq.s32.totalorder %s24, 0
      %p161 = por %p159, %p160
      %p162 = scmp.le.s32.totalorder 1, %s18
      %p163 = scmp.lt.s32.totalorder %s18, 3
      %p164 = pnand %p162, %p163
      %p165 = pneg %p164
      // Predicated region
      $region9: #{tpu_custom_call.1} parent=5 // pred_check
        _
      $region10: #{tpu_custom_call.1} parent=5 // pred_check_branch
        %167 = sbr.rel (%p164) target = $region12
      $region11: #{tpu_custom_call.1} parent=5 // pred_region
        %s168 = ssub.s32 %s18, 1
        // Predicated region
        $region13: #{tpu_custom_call.1} parent=11 // pred_check
          %p169 = pneg %p65
        $region14: #{tpu_custom_call.1} parent=11 // pred_check_branch
          %171 = sbr.rel (%p169) target = $region16
        $region15: #{tpu_custom_call.1} parent=11 // pred_region
          _
        $region16: #{tpu_custom_call.1} parent=11 // pred_fallthru
          _
        // Predicated region
        $region17: #{tpu_custom_call.1} parent=11 // pred_check
          %p172 = pneg %p86
        $region18: #{tpu_custom_call.1} parent=11 // pred_check_branch
          %174 = sbr.rel (%p172) target = $region20
        $region19: #{tpu_custom_call.1} parent=11 // pred_region
          _
        $region20: #{tpu_custom_call.1} parent=11 // pred_fallthru
          _
        // Predicated region
        $region21: #{tpu_custom_call.1} parent=11 // pred_check
          %p175 = pneg %p107
        $region22: #{tpu_custom_call.1} parent=11 // pred_check_branch
          %177 = sbr.rel (%p175) target = $region24
        $region23: #{tpu_custom_call.1} parent=11 // pred_region
          _
        $region24: #{tpu_custom_call.1} parent=11 // pred_fallthru
          _
        // Predicated region
        $region25: #{tpu_custom_call.1} parent=11 // pred_check
          %p178 = pneg %p128
        $region26: #{tpu_custom_call.1} parent=11 // pred_check_branch
          %180 = sbr.rel (%p178) target = $region28
        $region27: #{tpu_custom_call.1} parent=11 // pred_region
          %s182 = ssub.s32 512, 512
          %183 = vsyncadd [#allocation6], %s182
          %s184 = sshll.u32 [#allocation5], 4
          %s185 = int_to_ptr.vmem [resolvable:$true] %s184
          %190 = dma.hbm_to_vmem [thread:$0]  %s4, 512, %s185, [#allocation6], 128, 128, 8
        $region28: #{tpu_custom_call.1} parent=11 // pred_fallthru
          _
      $region12: #{tpu_custom_call.1} parent=5 // pred_fallthru
        _
      %p191 = scmp.lt.s32.totalorder %s18, 2
      // Predicated region
      $region29: #{tpu_custom_call.1} parent=5 // pred_check
        %p192 = pneg %p191
      $region30: #{tpu_custom_call.1} parent=5 // pred_check_branch
        %194 = sbr.rel (%p192) target = $region32
      $region31: #{tpu_custom_call.1} parent=5 // pred_region
        // Predicated region
        $region33: #{tpu_custom_call.1} parent=31 // pred_check
          %p195 = pneg %p38
        $region34: #{tpu_custom_call.1} parent=31 // pred_check_branch
          %197 = sbr.rel (%p195) target = $region36
        $region35: #{tpu_custom_call.1} parent=31 // pred_region
          %s198 = sand.u32 %s28, 1
          %s199 = scalar_lea.sflag [#allocation3], %s198
          %s200 = sand.u32 %s28, 1
          %s201 = smul.addr %s200, 8
          %s202 = scalar_lea.vmem [#allocation2], %s201
          %s204 = ssub.s32 128, 128
          %205 = vsyncadd %s199, %s204
          %s206 = smul.addr %s18, 128
          %s207 = scalar_lea.hbm %s0, %s206
          %s209 = sshll.u32 %s202, 4
          %s210 = int_to_ptr.vmem [resolvable:$true] %s209
          %212 = dma.hbm_to_vmem [thread:$0]  %s207, 128, %s210, %s199
        $region36: #{tpu_custom_call.1} parent=31 // pred_fallthru
          _
      $region32: #{tpu_custom_call.1} parent=5 // pred_fallthru
        _
      %p213 = scmp.le.s32.totalorder 1, %s18
      %p214 = scmp.lt.s32.totalorder %s18, 3
      %p215 = pnand %p213, %p214
      %p216 = pneg %p215
      // Predicated region
      $region37: #{tpu_custom_call.1} parent=5 // pred_check
        _
      $region38: #{tpu_custom_call.1} parent=5 // pred_check_branch
        %218 = sbr.rel (%p215) target = $region40
      $region39: #{tpu_custom_call.1} parent=5 // pred_region
        %s219 = ssub.s32 %s18, 1
        %s220 = sand.u32 %s31, 1
        %s221 = scalar_lea.sflag [#allocation3], %s220
        %s222 = sand.u32 %s31, 1
        %s223 = smul.addr %s222, 8
        %s224 = scalar_lea.vmem [#allocation2], %s223
        // Predicated region
        $region41: #{tpu_custom_call.1} parent=39 // pred_check
          %p225 = pneg %p44
        $region42: #{tpu_custom_call.1} parent=39 // pred_check_branch
          %227 = sbr.rel (%p225) target = $region44
        $region43: #{tpu_custom_call.1} parent=39 // pred_region
          %228 = dma.done %s221, 128
        $region44: #{tpu_custom_call.1} parent=39 // pred_fallthru
          _
        // Predicated region
        $region45: #{tpu_custom_call.1} parent=39 // pred_check
          %p229 = pneg %p128
        $region46: #{tpu_custom_call.1} parent=39 // pred_check_branch
          %231 = sbr.rel (%p229) target = $region48
        $region47: #{tpu_custom_call.1} parent=39 // pred_region
          %232 = dma.done [#allocation6], 512
        $region48: #{tpu_custom_call.1} parent=39 // pred_fallthru
          _
        %s233 = sand.u32 %s31, 1
        %s234 = scalar_lea.sflag [#allocation3], %s233
        %s235 = sand.u32 %s31, 1
        %s236 = smul.addr %s235, 8
        %s237 = scalar_lea.vmem [#allocation2], %s236
        %p238 = pneg %p44
        %p239 = pneg %p41
        %p240 = pneg %p65
        %p241 = pneg %p62
        %p242 = pneg %p86
        %p243 = pneg %p83
        %p244 = pneg %p107
        %p245 = pneg %p104
        %p246 = pneg %p128
        %p247 = pneg %p125
        %p248 = pneg %p154
        %p249 = pneg %p151
        %s250 = sand.u32 %s141, 1
        %s251 = scalar_lea.sflag [#allocation4], %s250
        %s252 = sand.u32 %s141, 1
        %s253 = scalar_lea.vmem [#allocation7], %s252
        %v254 = vld [vmem:[%s224] sm:$0xff]
        %v255 = vld [vmem:[%s1] sm:$0xff]
        %v256 = vld [vmem:[%s1 + $0x8] sm:$0xff]
        %v257 = vld [vmem:[%s1 + $0x10] sm:$0xff]
        %v258 = vld [vmem:[%s1 + $0x18] sm:$0xff]
        %v259 = vld [vmem:[%s2] sm:$0xf]
        %v260 = vld [vmem:[%s3] sm:$0xff]
        %v261 = vld [vmem:[%s3 + $0x8] sm:$0xff]
        %v262 = vld [vmem:[%s3 + $0x10] sm:$0xff]
        %v263 = vld [vmem:[%s3 + $0x18] sm:$0xff]
        %v264 = vld [vmem:[#allocation5] sm:$0xff]
        %v265 = vld [vmem:[#allocation5 + $0x8] sm:$0xff]
        %v266 = vld [vmem:[#allocation5 + $0x10] sm:$0xff]
        %v267 = vld [vmem:[#allocation5 + $0x18] sm:$0xff]
        %vm268 = vcmask 261120
        %v270 = vsel %vm268, %v254, 0
        %272 = vmatprep.subr.mxu0 0.0
        %273 = vmatpush1.msra.mxu0 %v255
        %274 = vmatprep.subr.mxu0 0.0
        %275 = vmatpush1.msra.mxu0 %v256
        %276 = vmatprep.subr.mxu0 0.0
        %277 = vmatpush1.msra.mxu0 %v257
        %278 = vmatprep.subr.mxu0 0.0
        %279 = vmatpush1.msra.mxu0 %v258
        %280 = vmatprep.subr.mxu0 0.0
        %281 = vmatpush1.msra.mxu0 0.0
        %282 = vmatprep.subr.mxu0 0.0
        %283 = vmatpush1.msra.mxu0 0.0
        %284 = vmatprep.subr.mxu0 0.0
        %285 = vmatpush1.msra.mxu0 0.0
        %286 = vmatprep.subr.mxu0 0.0
        %287 = vmatpush1.msra.mxu0 0.0
        %288 = vmatprep.subr.mxu0 0.0
        %289 = vmatpush1.msra.mxu0 0.0
        %290 = vmatprep.subr.mxu0 0.0
        %291 = vmatpush1.msra.mxu0 0.0
        %292 = vmatprep.subr.mxu0 0.0
        %293 = vmatpush1.msra.mxu0 0.0
        %294 = vmatprep.subr.mxu0 0.0
        %295 = vmatpush1.msra.mxu0 0.0
        %296 = vmatprep.subr.mxu0 0.0
        %297 = vmatpush1.msra.mxu0 0.0
        %298 = vmatprep.subr.mxu0 0.0
        %299 = vmatpush1.msra.mxu0 0.0
        %300 = vmatprep.subr.mxu0 0.0
        %301 = vmatpush1.msra.mxu0 0.0
        %302 = vmatprep.subr.mxu0 0.0
        %303 = vmatpush1.msra.mxu0 0.0
        %304 = vmatprep.subr.mxu0 0.0
        %305 = vmatpush1.msra.mxu0 0.0
        %306 = vmatprep.subr.mxu0 0.0
        %307 = vmatpush1.msra.mxu0 0.0
        %308 = vmatprep.subr.mxu0 0.0
        %309 = vmatpush1.msra.mxu0 0.0
        %310 = vmatprep.subr.mxu0 0.0
        %311 = vmatpush1.msra.mxu0 0.0
        %312 = vmatprep.subr.mxu0 0.0
        %313 = vmatpush1.msra.mxu0 0.0
        %314 = vmatprep.subr.mxu0 0.0
        %315 = vmatpush1.msra.mxu0 0.0
        %316 = vmatprep.subr.mxu0 0.0
        %317 = vmatpush1.msra.mxu0 0.0
        %318 = vmatprep.subr.mxu0 0.0
        %319 = vmatpush1.msra.mxu0 0.0
        %320 = vmatprep.subr.mxu0 0.0
        %321 = vmatpush1.msra.mxu0 0.0
        %322 = vmatprep.subr.mxu0 0.0
        %323 = vmatpush1.msra.mxu0 0.0
        %324 = vmatprep.subr.mxu0 0.0
        %325 = vmatpush1.msra.mxu0 0.0
        %326 = vmatprep.subr.mxu0 0.0
        %327 = vmatpush1.msra.mxu0 0.0
        %328 = vmatprep.subr.mxu0 0.0
        %329 = vmatpush1.msra.mxu0 0.0
        %330 = vmatprep.subr.mxu0 0.0
        %331 = vmatpush1.msra.mxu0 0.0
        %332 = vmatprep.subr.mxu0 0.0
        %333 = vmatpush1.msra.mxu0 0.0
        %334 = vmatprep.subr.mxu0 0.0
        %335 = vmatpush1.msra.mxu0 0.0
        %336 = vmatprep.mubr.f32.mxu0 0.0
        %337 = vmatmul.mubr.f32.gmra.mrb[0].mxu0 %v270
        %v338 = vpop.f32.mrb[0].mxu0
        %v339 = vadd.f32 0.0, %v338
        %v340 = vpop.f32.mrb[0].mxu0
        %341 = vdwg.mxu0
        %v342 = vsel %vm268, %v339, 0.0
        %v343 = vrot.slane %v342, 4
        %v344 = vadd.f32 %v342, %v343
        %v345 = vrot.slane %v344, 2
        %v346 = vadd.f32 %v344, %v345
        %v347 = vrot.slane %v346, 1
        %v348 = vadd.f32 %v346, %v347
        %v349 = vmul.f32 %v348, 0.25
        %v350 = vmul.f32 %v349, %v349
        %v352 = vsel %vm268, %v350, 0
        %354 = vmatprep.subr.mxu0 0.0
        %355 = vmatpush1.msra.mxu0 %v264
        %356 = vmatprep.subr.mxu0 0.0
        %357 = vmatpush1.msra.mxu0 %v265
        %358 = vmatprep.subr.mxu0 0.0
        %359 = vmatpush1.msra.mxu0 %v266
        %360 = vmatprep.subr.mxu0 0.0
        %361 = vmatpush1.msra.mxu0 %v267
        %362 = vmatprep.subr.mxu0 0.0
        %363 = vmatpush1.msra.mxu0 0.0
        %364 = vmatprep.subr.mxu0 0.0
        %365 = vmatpush1.msra.mxu0 0.0
        %366 = vmatprep.subr.mxu0 0.0
        %367 = vmatpush1.msra.mxu0 0.0
        %368 = vmatprep.subr.mxu0 0.0
        %369 = vmatpush1.msra.mxu0 0.0
        %370 = vmatprep.subr.mxu0 0.0
        %371 = vmatpush1.msra.mxu0 0.0
        %372 = vmatprep.subr.mxu0 0.0
        %373 = vmatpush1.msra.mxu0 0.0
        %374 = vmatprep.subr.mxu0 0.0
        %375 = vmatpush1.msra.mxu0 0.0
        %376 = vmatprep.subr.mxu0 0.0
        %377 = vmatpush1.msra.mxu0 0.0
        %378 = vmatprep.subr.mxu0 0.0
        %379 = vmatpush1.msra.mxu0 0.0
        %380 = vmatprep.subr.mxu0 0.0
        %381 = vmatpush1.msra.mxu0 0.0
        %382 = vmatprep.subr.mxu0 0.0
        %383 = vmatpush1.msra.mxu0 0.0
        %384 = vmatprep.subr.mxu0 0.0
        %385 = vmatpush1.msra.mxu0 0.0
        %386 = vmatprep.subr.mxu0 0.0
        %387 = vmatpush1.msra.mxu0 0.0
        %388 = vmatprep.subr.mxu0 0.0
        %389 = vmatpush1.msra.mxu0 0.0
        %390 = vmatprep.subr.mxu0 0.0
        %391 = vmatpush1.msra.mxu0 0.0
        %392 = vmatprep.subr.mxu0 0.0
        %393 = vmatpush1.msra.mxu0 0.0
        %394 = vmatprep.subr.mxu0 0.0
        %395 = vmatpush1.msra.mxu0 0.0
        %396 = vmatprep.subr.mxu0 0.0
        %397 = vmatpush1.msra.mxu0 0.0
        %398 = vmatprep.subr.mxu0 0.0
        %399 = vmatpush1.msra.mxu0 0.0
        %400 = vmatprep.subr.mxu0 0.0
        %401 = vmatpush1.msra.mxu0 0.0
        %402 = vmatprep.subr.mxu0 0.0
        %403 = vmatpush1.msra.mxu0 0.0
        %404 = vmatprep.subr.mxu0 0.0
        %405 = vmatpush1.msra.mxu0 0.0
        %406 = vmatprep.subr.mxu0 0.0
        %407 = vmatpush1.msra.mxu0 0.0
        %408 = vmatprep.subr.mxu0 0.0
        %409 = vmatpush1.msra.mxu0 0.0
        %410 = vmatprep.subr.mxu0 0.0
        %411 = vmatpush1.msra.mxu0 0.0
        %412 = vmatprep.subr.mxu0 0.0
        %413 = vmatpush1.msra.mxu0 0.0
        %414 = vmatprep.subr.mxu0 0.0
        %415 = vmatpush1.msra.mxu0 0.0
        %416 = vmatprep.subr.mxu0 0.0
        %417 = vmatpush1.msra.mxu0 0.0
        %418 = vmatprep.mubr.f32.mxu0 0.0
        %419 = vmatmul.mubr.f32.gmra.mrb[0].mxu0 %v352
        %v420 = vpop.f32.mrb[0].mxu0
        %v421 = vadd.f32 1e-07, %v420
        %v422 = vpop.f32.mrb[0].mxu0
        %423 = vdwg.mxu0
        %v424 = vrsqrt.pop %v421
        %v425 = vmul.f32 %v349, %v424
        %v426 = vlaneseq
        %v427 = vshrl.u32 %v426, 7
        %v428 = vsub.s32 0, %v427
        %v429 = vrot.slane %v425, %v428
        %v430 = vmul.f32 %v339, %v429
        %v432 = vsel %vm268, %v430, 0
        %434 = vmatprep.subr.mxu0 0.0
        %435 = vmatpush1.msra.mxu0 %v260
        %436 = vmatprep.subr.mxu0 0.0
        %437 = vmatpush1.msra.mxu0 %v261
        %438 = vmatprep.subr.mxu0 0.0
        %439 = vmatpush1.msra.mxu0 %v262
        %440 = vmatprep.subr.mxu0 0.0
        %441 = vmatpush1.msra.mxu0 %v263
        %442 = vmatprep.subr.mxu0 0.0
        %443 = vmatpush1.msra.mxu0 0.0
        %444 = vmatprep.subr.mxu0 0.0
        %445 = vmatpush1.msra.mxu0 0.0
        %446 = vmatprep.subr.mxu0 0.0
        %447 = vmatpush1.msra.mxu0 0.0
        %448 = vmatprep.subr.mxu0 0.0
        %449 = vmatpush1.msra.mxu0 0.0
        %450 = vmatprep.subr.mxu0 0.0
        %451 = vmatpush1.msra.mxu0 0.0
        %452 = vmatprep.subr.mxu0 0.0
        %453 = vmatpush1.msra.mxu0 0.0
        %454 = vmatprep.subr.mxu0 0.0
        %455 = vmatpush1.msra.mxu0 0.0
        %456 = vmatprep.subr.mxu0 0.0
        %457 = vmatpush1.msra.mxu0 0.0
        %458 = vmatprep.subr.mxu0 0.0
        %459 = vmatpush1.msra.mxu0 0.0
        %460 = vmatprep.subr.mxu0 0.0
        %461 = vmatpush1.msra.mxu0 0.0
        %462 = vmatprep.subr.mxu0 0.0
        %463 = vmatpush1.msra.mxu0 0.0
        %464 = vmatprep.subr.mxu0 0.0
        %465 = vmatpush1.msra.mxu0 0.0
        %466 = vmatprep.subr.mxu0 0.0
        %467 = vmatpush1.msra.mxu0 0.0
        %468 = vmatprep.subr.mxu0 0.0
        %469 = vmatpush1.msra.mxu0 0.0
        %470 = vmatprep.subr.mxu0 0.0
        %471 = vmatpush1.msra.mxu0 0.0
        %472 = vmatprep.subr.mxu0 0.0
        %473 = vmatpush1.msra.mxu0 0.0
        %474 = vmatprep.subr.mxu0 0.0
        %475 = vmatpush1.msra.mxu0 0.0
        %476 = vmatprep.subr.mxu0 0.0
        %477 = vmatpush1.msra.mxu0 0.0
        %478 = vmatprep.subr.mxu0 0.0
        %479 = vmatpush1.msra.mxu0 0.0
        %480 = vmatprep.subr.mxu0 0.0
        %481 = vmatpush1.msra.mxu0 0.0
        %482 = vmatprep.subr.mxu0 0.0
        %483 = vmatpush1.msra.mxu0 0.0
        %484 = vmatprep.subr.mxu0 0.0
        %485 = vmatpush1.msra.mxu0 0.0
        %486 = vmatprep.subr.mxu0 0.0
        %487 = vmatpush1.msra.mxu0 0.0
        %488 = vmatprep.subr.mxu0 0.0
        %489 = vmatpush1.msra.mxu0 0.0
        %490 = vmatprep.subr.mxu0 0.0
        %491 = vmatpush1.msra.mxu0 0.0
        %492 = vmatprep.subr.mxu0 0.0
        %493 = vmatpush1.msra.mxu0 0.0
        %494 = vmatprep.subr.mxu0 0.0
        %495 = vmatpush1.msra.mxu0 0.0
        %496 = vmatprep.subr.mxu0 0.0
        %497 = vmatpush1.msra.mxu0 0.0
        %498 = vmatprep.mubr.f32.mxu0 0.0
        %499 = vmatmul.mubr.f32.gmra.mrb[0].mxu0 %v432
        %v500 = vpop.f32.mrb[0].mxu0
        %v501 = vadd.f32 0.0, %v500
        %v502 = vpop.f32.mrb[0].mxu0
        %503 = vdwg.mxu0
        %vm504 = vcmask 31744
        %v505 = vsel %vm504, %v501, -inf
        %506 = vmax.xlane.f32.xlu0 %v505
        %v507 = vpop.xlane.xlu0 %506
        %v508 = vsub.f32 %v501, %v507
        %v509 = vmul.f32 %v508, 1.442695
        %v510 = vpow.pop %v509
        %v511 = vsel %vm504, %v510, 0.0
        %512 = vadd.xlane.f32.xlu0 %v511
        %v513 = vpop.xlane.xlu0 %512
        %v514 = vrcp.pop %v513
        %v515 = vmul.f32 %v510, %v514
        %v517 = vsel %vm504, %v515, 0
        %vm519 = vcmask 1043456
        %v521 = vsel %vm519, %v259, 0
        %523 = vmatprep.subr.mxu0 0.0
        %524 = vmatpush1.msra.mxu0 %v521
        %525 = vmatprep.subr.mxu0 0.0
        %526 = vmatpush1.msra.mxu0 0.0
        %527 = vmatprep.subr.mxu0 0.0
        %528 = vmatpush1.msra.mxu0 0.0
        %529 = vmatprep.subr.mxu0 0.0
        %530 = vmatpush1.msra.mxu0 0.0
        %531 = vmatprep.subr.mxu0 0.0
        %532 = vmatpush1.msra.mxu0 0.0
        %533 = vmatprep.subr.mxu0 0.0
        %534 = vmatpush1.msra.mxu0 0.0
        %535 = vmatprep.subr.mxu0 0.0
        %536 = vmatpush1.msra.mxu0 0.0
        %537 = vmatprep.subr.mxu0 0.0
        %538 = vmatpush1.msra.mxu0 0.0
        %539 = vmatprep.subr.mxu0 0.0
        %540 = vmatpush1.msra.mxu0 0.0
        %541 = vmatprep.subr.mxu0 0.0
        %542 = vmatpush1.msra.mxu0 0.0
        %543 = vmatprep.subr.mxu0 0.0
        %544 = vmatpush1.msra.mxu0 0.0
        %545 = vmatprep.subr.mxu0 0.0
        %546 = vmatpush1.msra.mxu0 0.0
        %547 = vmatprep.subr.mxu0 0.0
        %548 = vmatpush1.msra.mxu0 0.0
        %549 = vmatprep.subr.mxu0 0.0
        %550 = vmatpush1.msra.mxu0 0.0
        %551 = vmatprep.subr.mxu0 0.0
        %552 = vmatpush1.msra.mxu0 0.0
        %553 = vmatprep.subr.mxu0 0.0
        %554 = vmatpush1.msra.mxu0 0.0
        %555 = vmatprep.subr.mxu0 0.0
        %556 = vmatpush1.msra.mxu0 0.0
        %557 = vmatprep.subr.mxu0 0.0
        %558 = vmatpush1.msra.mxu0 0.0
        %559 = vmatprep.subr.mxu0 0.0
        %560 = vmatpush1.msra.mxu0 0.0
        %561 = vmatprep.subr.mxu0 0.0
        %562 = vmatpush1.msra.mxu0 0.0
        %563 = vmatprep.subr.mxu0 0.0
        %564 = vmatpush1.msra.mxu0 0.0
        %565 = vmatprep.subr.mxu0 0.0
        %566 = vmatpush1.msra.mxu0 0.0
        %567 = vmatprep.subr.mxu0 0.0
        %568 = vmatpush1.msra.mxu0 0.0
        %569 = vmatprep.subr.mxu0 0.0
        %570 = vmatpush1.msra.mxu0 0.0
        %571 = vmatprep.subr.mxu0 0.0
        %572 = vmatpush1.msra.mxu0 0.0
        %573 = vmatprep.subr.mxu0 0.0
        %574 = vmatpush1.msra.mxu0 0.0
        %575 = vmatprep.subr.mxu0 0.0
        %576 = vmatpush1.msra.mxu0 0.0
        %577 = vmatprep.subr.mxu0 0.0
        %578 = vmatpush1.msra.mxu0 0.0
        %579 = vmatprep.subr.mxu0 0.0
        %580 = vmatpush1.msra.mxu0 0.0
        %581 = vmatprep.subr.mxu0 0.0
        %582 = vmatpush1.msra.mxu0 0.0
        %583 = vmatprep.subr.mxu0 0.0
        %584 = vmatpush1.msra.mxu0 0.0
        %585 = vmatprep.subr.mxu0 0.0
        %586 = vmatpush1.msra.mxu0 0.0
        %587 = vmatprep.mubr.f32.mxu0 0.0
        %588 = vmatmul.mubr.f32.gmra.mrb[0].mxu0 %v517
        %v589 = vpop.f32.mrb[0].mxu0
        %v590 = vadd.f32 0.0, %v589
        %v591 = vpop.f32.mrb[0].mxu0
        %592 = vdwg.mxu0
        %v593 = vmul.f32 %v590, %v339
        %v594 = vsel %vm268, %v593, 0.0
        %v595 = vrot.slane %v594, 4
        %v596 = vadd.f32 %v594, %v595
        %v597 = vrot.slane %v596, 2
        %v598 = vadd.f32 %v596, %v597
        %v599 = vrot.slane %v598, 1
        %v600 = vadd.f32 %v598, %v599
        %v601 = vmul.f32 %v600, %v600
        %v603 = vsel %vm268, %v601, 0
        %605 = vmatprep.subr.mxu0 0.0
        %606 = vmatpush1.msra.mxu0 %v264
        %607 = vmatprep.subr.mxu0 0.0
        %608 = vmatpush1.msra.mxu0 %v265
        %609 = vmatprep.subr.mxu0 0.0
        %610 = vmatpush1.msra.mxu0 %v266
        %611 = vmatprep.subr.mxu0 0.0
        %612 = vmatpush1.msra.mxu0 %v267
        %613 = vmatprep.subr.mxu0 0.0
        %614 = vmatpush1.msra.mxu0 0.0
        %615 = vmatprep.subr.mxu0 0.0
        %616 = vmatpush1.msra.mxu0 0.0
        %617 = vmatprep.subr.mxu0 0.0
        %618 = vmatpush1.msra.mxu0 0.0
        %619 = vmatprep.subr.mxu0 0.0
        %620 = vmatpush1.msra.mxu0 0.0
        %621 = vmatprep.subr.mxu0 0.0
        %622 = vmatpush1.msra.mxu0 0.0
        %623 = vmatprep.subr.mxu0 0.0
        %624 = vmatpush1.msra.mxu0 0.0
        %625 = vmatprep.subr.mxu0 0.0
        %626 = vmatpush1.msra.mxu0 0.0
        %627 = vmatprep.subr.mxu0 0.0
        %628 = vmatpush1.msra.mxu0 0.0
        %629 = vmatprep.subr.mxu0 0.0
        %630 = vmatpush1.msra.mxu0 0.0
        %631 = vmatprep.subr.mxu0 0.0
        %632 = vmatpush1.msra.mxu0 0.0
        %633 = vmatprep.subr.mxu0 0.0
        %634 = vmatpush1.msra.mxu0 0.0
        %635 = vmatprep.subr.mxu0 0.0
        %636 = vmatpush1.msra.mxu0 0.0
        %637 = vmatprep.subr.mxu0 0.0
        %638 = vmatpush1.msra.mxu0 0.0
        %639 = vmatprep.subr.mxu0 0.0
        %640 = vmatpush1.msra.mxu0 0.0
        %641 = vmatprep.subr.mxu0 0.0
        %642 = vmatpush1.msra.mxu0 0.0
        %643 = vmatprep.subr.mxu0 0.0
        %644 = vmatpush1.msra.mxu0 0.0
        %645 = vmatprep.subr.mxu0 0.0
        %646 = vmatpush1.msra.mxu0 0.0
        %647 = vmatprep.subr.mxu0 0.0
        %648 = vmatpush1.msra.mxu0 0.0
        %649 = vmatprep.subr.mxu0 0.0
        %650 = vmatpush1.msra.mxu0 0.0
        %651 = vmatprep.subr.mxu0 0.0
        %652 = vmatpush1.msra.mxu0 0.0
        %653 = vmatprep.subr.mxu0 0.0
        %654 = vmatpush1.msra.mxu0 0.0
        %655 = vmatprep.subr.mxu0 0.0
        %656 = vmatpush1.msra.mxu0 0.0
        %657 = vmatprep.subr.mxu0 0.0
        %658 = vmatpush1.msra.mxu0 0.0
        %659 = vmatprep.subr.mxu0 0.0
        %660 = vmatpush1.msra.mxu0 0.0
        %661 = vmatprep.subr.mxu0 0.0
        %662 = vmatpush1.msra.mxu0 0.0
        %663 = vmatprep.subr.mxu0 0.0
        %664 = vmatpush1.msra.mxu0 0.0
        %665 = vmatprep.subr.mxu0 0.0
        %666 = vmatpush1.msra.mxu0 0.0
        %667 = vmatprep.subr.mxu0 0.0
        %668 = vmatpush1.msra.mxu0 0.0
        %669 = vmatprep.mubr.f32.mxu0 0.0
        %670 = vmatmul.mubr.f32.gmra.mrb[0].mxu0 %v603
        %v671 = vpop.f32.mrb[0].mxu0
        %v672 = vadd.f32 1e-07, %v671
        %v673 = vpop.f32.mrb[0].mxu0
        %674 = vdwg.mxu0
        %v675 = vrsqrt.pop %v672
        %v676 = vmul.f32 %v600, %v675
        %v677 = vlaneseq
        %v678 = vshrl.u32 %v677, 7
        %v679 = vsub.s32 0, %v678
        %v680 = vrot.slane %v676, %v679
        %v681 = vmul.f32 %v339, %v680
        %v683 = vsel %vm268, %v681, 0
        %685 = vmatprep.subr.mxu0 0.0
        %686 = vmatpush1.msra.mxu0 %v260
        %687 = vmatprep.subr.mxu0 0.0
        %688 = vmatpush1.msra.mxu0 %v261
        %689 = vmatprep.subr.mxu0 0.0
        %690 = vmatpush1.msra.mxu0 %v262
        %691 = vmatprep.subr.mxu0 0.0
        %692 = vmatpush1.msra.mxu0 %v263
        %693 = vmatprep.subr.mxu0 0.0
        %694 = vmatpush1.msra.mxu0 0.0
        %695 = vmatprep.subr.mxu0 0.0
        %696 = vmatpush1.msra.mxu0 0.0
        %697 = vmatprep.subr.mxu0 0.0
        %698 = vmatpush1.msra.mxu0 0.0
        %699 = vmatprep.subr.mxu0 0.0
        %700 = vmatpush1.msra.mxu0 0.0
        %701 = vmatprep.subr.mxu0 0.0
        %702 = vmatpush1.msra.mxu0 0.0
        %703 = vmatprep.subr.mxu0 0.0
        %704 = vmatpush1.msra.mxu0 0.0
        %705 = vmatprep.subr.mxu0 0.0
        %706 = vmatpush1.msra.mxu0 0.0
        %707 = vmatprep.subr.mxu0 0.0
        %708 = vmatpush1.msra.mxu0 0.0
        %709 = vmatprep.subr.mxu0 0.0
        %710 = vmatpush1.msra.mxu0 0.0
        %711 = vmatprep.subr.mxu0 0.0
        %712 = vmatpush1.msra.mxu0 0.0
        %713 = vmatprep.subr.mxu0 0.0
        %714 = vmatpush1.msra.mxu0 0.0
        %715 = vmatprep.subr.mxu0 0.0
        %716 = vmatpush1.msra.mxu0 0.0
        %717 = vmatprep.subr.mxu0 0.0
        %718 = vmatpush1.msra.mxu0 0.0
        %719 = vmatprep.subr.mxu0 0.0
        %720 = vmatpush1.msra.mxu0 0.0
        %721 = vmatprep.subr.mxu0 0.0
        %722 = vmatpush1.msra.mxu0 0.0
        %723 = vmatprep.subr.mxu0 0.0
        %724 = vmatpush1.msra.mxu0 0.0
        %725 = vmatprep.subr.mxu0 0.0
        %726 = vmatpush1.msra.mxu0 0.0
        %727 = vmatprep.subr.mxu0 0.0
        %728 = vmatpush1.msra.mxu0 0.0
        %729 = vmatprep.subr.mxu0 0.0
        %730 = vmatpush1.msra.mxu0 0.0
        %731 = vmatprep.subr.mxu0 0.0
        %732 = vmatpush1.msra.mxu0 0.0
        %733 = vmatprep.subr.mxu0 0.0
        %734 = vmatpush1.msra.mxu0 0.0
        %735 = vmatprep.subr.mxu0 0.0
        %736 = vmatpush1.msra.mxu0 0.0
        %737 = vmatprep.subr.mxu0 0.0
        %738 = vmatpush1.msra.mxu0 0.0
        %739 = vmatprep.subr.mxu0 0.0
        %740 = vmatpush1.msra.mxu0 0.0
        %741 = vmatprep.subr.mxu0 0.0
        %742 = vmatpush1.msra.mxu0 0.0
        %743 = vmatprep.subr.mxu0 0.0
        %744 = vmatpush1.msra.mxu0 0.0
        %745 = vmatprep.subr.mxu0 0.0
        %746 = vmatpush1.msra.mxu0 0.0
        %747 = vmatprep.subr.mxu0 0.0
        %748 = vmatpush1.msra.mxu0 0.0
        %749 = vmatprep.mubr.f32.mxu0 0.0
        %750 = vmatmul.mubr.f32.gmra.mrb[0].mxu0 %v683
        %v751 = vpop.f32.mrb[0].mxu0
        %v752 = vadd.f32 0.0, %v751
        %v753 = vpop.f32.mrb[0].mxu0
        %754 = vdwg.mxu0
        %v755 = vsel %vm504, %v752, -inf
        %756 = vmax.xlane.f32.xlu0 %v755
        %v757 = vpop.xlane.xlu0 %756
        %v758 = vsub.f32 %v752, %v757
        %v759 = vmul.f32 %v758, 1.442695
        %v760 = vpow.pop %v759
        %v761 = vsel %vm504, %v760, 0.0
        %762 = vadd.xlane.f32.xlu0 %v761
        %v763 = vpop.xlane.xlu0 %762
        %v764 = vrcp.pop %v763
        %v765 = vmul.f32 %v760, %v764
        %v767 = vsel %vm504, %v765, 0
        %769 = vmatprep.subr.mxu0 0.0
        %770 = vmatpush1.msra.mxu0 %v521
        %771 = vmatprep.subr.mxu0 0.0
        %772 = vmatpush1.msra.mxu0 0.0
        %773 = vmatprep.subr.mxu0 0.0
        %774 = vmatpush1.msra.mxu0 0.0
        %775 = vmatprep.subr.mxu0 0.0
        %776 = vmatpush1.msra.mxu0 0.0
        %777 = vmatprep.subr.mxu0 0.0
        %778 = vmatpush1.msra.mxu0 0.0
        %779 = vmatprep.subr.mxu0 0.0
        %780 = vmatpush1.msra.mxu0 0.0
        %781 = vmatprep.subr.mxu0 0.0
        %782 = vmatpush1.msra.mxu0 0.0
        %783 = vmatprep.subr.mxu0 0.0
        %784 = vmatpush1.msra.mxu0 0.0
        %785 = vmatprep.subr.mxu0 0.0
        %786 = vmatpush1.msra.mxu0 0.0
        %787 = vmatprep.subr.mxu0 0.0
        %788 = vmatpush1.msra.mxu0 0.0
        %789 = vmatprep.subr.mxu0 0.0
        %790 = vmatpush1.msra.mxu0 0.0
        %791 = vmatprep.subr.mxu0 0.0
        %792 = vmatpush1.msra.mxu0 0.0
        %793 = vmatprep.subr.mxu0 0.0
        %794 = vmatpush1.msra.mxu0 0.0
        %795 = vmatprep.subr.mxu0 0.0
        %796 = vmatpush1.msra.mxu0 0.0
        %797 = vmatprep.subr.mxu0 0.0
        %798 = vmatpush1.msra.mxu0 0.0
        %799 = vmatprep.subr.mxu0 0.0
        %800 = vmatpush1.msra.mxu0 0.0
        %801 = vmatprep.subr.mxu0 0.0
        %802 = vmatpush1.msra.mxu0 0.0
        %803 = vmatprep.subr.mxu0 0.0
        %804 = vmatpush1.msra.mxu0 0.0
        %805 = vmatprep.subr.mxu0 0.0
        %806 = vmatpush1.msra.mxu0 0.0
        %807 = vmatprep.subr.mxu0 0.0
        %808 = vmatpush1.msra.mxu0 0.0
        %809 = vmatprep.subr.mxu0 0.0
        %810 = vmatpush1.msra.mxu0 0.0
        %811 = vmatprep.subr.mxu0 0.0
        %812 = vmatpush1.msra.mxu0 0.0
        %813 = vmatprep.subr.mxu0 0.0
        %814 = vmatpush1.msra.mxu0 0.0
        %815 = vmatprep.subr.mxu0 0.0
        %816 = vmatpush1.msra.mxu0 0.0
        %817 = vmatprep.subr.mxu0 0.0
        %818 = vmatpush1.msra.mxu0 0.0
        %819 = vmatprep.subr.mxu0 0.0
        %820 = vmatpush1.msra.mxu0 0.0
        %821 = vmatprep.subr.mxu0 0.0
        %822 = vmatpush1.msra.mxu0 0.0
        %823 = vmatprep.subr.mxu0 0.0
        %824 = vmatpush1.msra.mxu0 0.0
        %825 = vmatprep.subr.mxu0 0.0
        %826 = vmatpush1.msra.mxu0 0.0
        %827 = vmatprep.subr.mxu0 0.0
        %828 = vmatpush1.msra.mxu0 0.0
        %829 = vmatprep.subr.mxu0 0.0
        %830 = vmatpush1.msra.mxu0 0.0
        %831 = vmatprep.subr.mxu0 0.0
        %832 = vmatpush1.msra.mxu0 0.0
        %833 = vmatprep.mubr.f32.mxu0 0.0
        %834 = vmatmul.mubr.f32.gmra.mrb[0].mxu0 %v767
        %v835 = vpop.f32.mrb[0].mxu0
        %v836 = vadd.f32 0.0, %v835
        %v837 = vpop.f32.mrb[0].mxu0
        %838 = vdwg.mxu0
        %v839 = vmul.f32 %v836, %v339
        %v840 = vsel %vm268, %v839, 0.0
        %v841 = vrot.slane %v840, 4
        %v842 = vadd.f32 %v840, %v841
        %v843 = vrot.slane %v842, 2
        %v844 = vadd.f32 %v842, %v843
        %v845 = vrot.slane %v844, 1
        %v846 = vadd.f32 %v844, %v845
        %v847 = vmul.f32 %v846, %v846
        %v849 = vsel %vm268, %v847, 0
        %851 = vmatprep.subr.mxu0 0.0
        %852 = vmatpush1.msra.mxu0 %v264
        %853 = vmatprep.subr.mxu0 0.0
        %854 = vmatpush1.msra.mxu0 %v265
        %855 = vmatprep.subr.mxu0 0.0
        %856 = vmatpush1.msra.mxu0 %v266
        %857 = vmatprep.subr.mxu0 0.0
        %858 = vmatpush1.msra.mxu0 %v267
        %859 = vmatprep.subr.mxu0 0.0
        %860 = vmatpush1.msra.mxu0 0.0
        %861 = vmatprep.subr.mxu0 0.0
        %862 = vmatpush1.msra.mxu0 0.0
        %863 = vmatprep.subr.mxu0 0.0
        %864 = vmatpush1.msra.mxu0 0.0
        %865 = vmatprep.subr.mxu0 0.0
        %866 = vmatpush1.msra.mxu0 0.0
        %867 = vmatprep.subr.mxu0 0.0
        %868 = vmatpush1.msra.mxu0 0.0
        %869 = vmatprep.subr.mxu0 0.0
        %870 = vmatpush1.msra.mxu0 0.0
        %871 = vmatprep.subr.mxu0 0.0
        %872 = vmatpush1.msra.mxu0 0.0
        %873 = vmatprep.subr.mxu0 0.0
        %874 = vmatpush1.msra.mxu0 0.0
        %875 = vmatprep.subr.mxu0 0.0
        %876 = vmatpush1.msra.mxu0 0.0
        %877 = vmatprep.subr.mxu0 0.0
        %878 = vmatpush1.msra.mxu0 0.0
        %879 = vmatprep.subr.mxu0 0.0
        %880 = vmatpush1.msra.mxu0 0.0
        %881 = vmatprep.subr.mxu0 0.0
        %882 = vmatpush1.msra.mxu0 0.0
        %883 = vmatprep.subr.mxu0 0.0
        %884 = vmatpush1.msra.mxu0 0.0
        %885 = vmatprep.subr.mxu0 0.0
        %886 = vmatpush1.msra.mxu0 0.0
        %887 = vmatprep.subr.mxu0 0.0
        %888 = vmatpush1.msra.mxu0 0.0
        %889 = vmatprep.subr.mxu0 0.0
        %890 = vmatpush1.msra.mxu0 0.0
        %891 = vmatprep.subr.mxu0 0.0
        %892 = vmatpush1.msra.mxu0 0.0
        %893 = vmatprep.subr.mxu0 0.0
        %894 = vmatpush1.msra.mxu0 0.0
        %895 = vmatprep.subr.mxu0 0.0
        %896 = vmatpush1.msra.mxu0 0.0
        %897 = vmatprep.subr.mxu0 0.0
        %898 = vmatpush1.msra.mxu0 0.0
        %899 = vmatprep.subr.mxu0 0.0
        %900 = vmatpush1.msra.mxu0 0.0
        %901 = vmatprep.subr.mxu0 0.0
        %902 = vmatpush1.msra.mxu0 0.0
        %903 = vmatprep.subr.mxu0 0.0
        %904 = vmatpush1.msra.mxu0 0.0
        %905 = vmatprep.subr.mxu0 0.0
        %906 = vmatpush1.msra.mxu0 0.0
        %907 = vmatprep.subr.mxu0 0.0
        %908 = vmatpush1.msra.mxu0 0.0
        %909 = vmatprep.subr.mxu0 0.0
        %910 = vmatpush1.msra.mxu0 0.0
        %911 = vmatprep.subr.mxu0 0.0
        %912 = vmatpush1.msra.mxu0 0.0
        %913 = vmatprep.subr.mxu0 0.0
        %914 = vmatpush1.msra.mxu0 0.0
        %915 = vmatprep.mubr.f32.mxu0 0.0
        %916 = vmatmul.mubr.f32.gmra.mrb[0].mxu0 %v849
        %v917 = vpop.f32.mrb[0].mxu0
        %v918 = vadd.f32 1e-07, %v917
        %v919 = vpop.f32.mrb[0].mxu0
        %920 = vdwg.mxu0
        %v921 = vrsqrt.pop %v918
        %v922 = vmul.f32 %v846, %v921
        %vm923 = vcmask 253952
        %924 = vst.msk [vmem:[%s253] sm:$0x1] %vm923, %v922
        %s925 = sand.u32 %s141, 1
        %s926 = scalar_lea.sflag [#allocation4], %s925
        %s927 = sand.u32 %s141, 1
        %s928 = scalar_lea.vmem [#allocation7], %s927
        // Predicated region
        $region49: #{tpu_custom_call.1} parent=39 // pred_check
          %p929 = pneg %p151
        $region50: #{tpu_custom_call.1} parent=39 // pred_check_branch
          %931 = sbr.rel (%p929) target = $region52
        $region51: #{tpu_custom_call.1} parent=39 // pred_region
          %s933 = ssub.s32 16, 16
          %934 = vsyncadd %s926, %s933
          %s935 = smul.addr %s23, 16
          %s936 = scalar_lea.hbm %s5, %s935
          %s938 = sshll.u32 %s928, 4
          %s939 = int_to_ptr.vmem [resolvable:$true] %s938
          %941 = dma.vmem_to_hbm [thread:$0]  %s939, 16, %s936, %s926
        $region52: #{tpu_custom_call.1} parent=39 // pred_fallthru
          _
      $region40: #{tpu_custom_call.1} parent=5 // pred_fallthru
        _
      %p942 = scmp.le.s32.totalorder 2, %s18
      // Predicated region
      $region53: #{tpu_custom_call.1} parent=5 // pred_check
        %p943 = pneg %p942
      $region54: #{tpu_custom_call.1} parent=5 // pred_check_branch
        %945 = sbr.rel (%p943) target = $region56
      $region55: #{tpu_custom_call.1} parent=5 // pred_region
        %s946 = ssub.s32 %s18, 2
        // Predicated region
        $region57: #{tpu_custom_call.1} parent=55 // pred_check
          %p947 = pneg %p157
        $region58: #{tpu_custom_call.1} parent=55 // pred_check_branch
          %949 = sbr.rel (%p947) target = $region60
        $region59: #{tpu_custom_call.1} parent=55 // pred_region
          %s950 = sand.u32 %s142, 1
          %s951 = scalar_lea.sflag [#allocation4], %s950
          %s952 = sand.u32 %s142, 1
          %s953 = scalar_lea.vmem [#allocation7], %s952
          %954 = dma.done %s951, 16
        $region60: #{tpu_custom_call.1} parent=55 // pred_fallthru
          _
      $region56: #{tpu_custom_call.1} parent=5 // pred_fallthru
        _
    $region6: #{tpu_custom_call.1} parent=1 // loop_footer
      %s22 = sadd.s32 1, %s18
    $region7: #{tpu_custom_call.1} parent=1 // loop_footer_branch
      %17 = sbr.rel target = $region3
    $region8: #{tpu_custom_call.1} parent=1 // loop_exit
      _
    %955 = vsyncpa [#allocation3], 1
    %s956 = scalar_lea.sflag [#allocation3], 1
    %957 = vsyncpa %s956, 1
    %958 = vsyncpa [#allocation6], 1
    %959 = vsyncpa [#allocation4], 1
    %s960 = scalar_lea.sflag [#allocation4], 1
    %961 = vsyncpa %s960, 1

</llo_original>
